<compile_context>
chip_gen: v7x
topology: tpu7x:2x2x1
jax: 0.10.0
libtpu: 0.0.40
codegen_flags: <defaults>
</compile_context>

<pallas_src>
import functools
from typing import NamedTuple

import jax
import jax.numpy as jnp
from jax.experimental import pallas as pl
from jax.experimental.pallas import tpu as pltpu


def _round_up(x, m):
    return ((x + m - 1) // m) * m


class PackedParams(NamedTuple):
    slab: jax.Array          # (total_rows, lane_width) f32 weight/bias/mask slab
    input_size: int
    hidden_size: int
    output_size: int
    lane_width: int
    off_b1: int
    off_w2: int
    off_b2: int
    off_amask: int
    off_cmask: int
    total_rows: int


def init_params(key, input_size, hidden_size, output_size):
    """Deterministic synthetic params; same shapes/init style as the PyTorch module."""
    ks = jax.random.split(key, 8)

    def lin(kw, kb, fan_in, fan_out):
        bound = 1.0 / jnp.sqrt(jnp.float32(fan_in))
        w = jax.random.uniform(kw, (fan_out, fan_in), jnp.float32, -bound, bound)
        b = jax.random.uniform(kb, (fan_out,), jnp.float32, -bound, bound)
        return w, b

    w1a, b1a = lin(ks[0], ks[1], input_size, hidden_size)
    w2a, b2a = lin(ks[2], ks[3], hidden_size, output_size)
    w1c, b1c = lin(ks[4], ks[5], input_size, hidden_size)
    w2c, b2c = lin(ks[6], ks[7], hidden_size, 1)
    return (w1a, b1a, w2a, b2a, w1c, b1c, w2c, b2c)


def pack_params(params, input_size, hidden_size, output_size):
    """ONE-TIME packing of the 8 PyTorch-layout tensors (+ masks) into one padded slab."""
    w1a, b1a, w2a, b2a, w1c, b1c, w2c, b2c = params
    h2 = 2 * hidden_size                                     # fused hidden width
    lane_width = max(_round_up(h2, 128), _round_up(output_size + 1, 128))

    off_b1 = _round_up(input_size, 8)                        # 8-sublane aligned rows
    off_w2 = off_b1 + 8
    off_b2 = off_w2 + lane_width
    off_amask = off_b2 + 8
    off_cmask = off_amask + 8
    total_rows = off_cmask + 8

    slab = jnp.zeros((total_rows, lane_width), jnp.float32)

    # layer 1: fused [actor | critic] hidden projection
    w1 = jnp.concatenate([w1a.T, w1c.T], axis=1)             # (I, 2H)
    b1 = jnp.concatenate([b1a, b1c], axis=0)                 # (2H,)
    slab = slab.at[:input_size, :h2].set(w1)
    slab = slab.at[off_b1, :h2].set(b1)

    # layer 2: block-diagonal -> one dot gives [actor logits | critic value]
    slab = slab.at[off_w2:off_w2 + hidden_size, :output_size].set(w2a.T)
    slab = slab.at[off_w2 + hidden_size:off_w2 + h2, output_size].set(w2c[0, :])
    slab = slab.at[off_b2, :output_size].set(b2a)
    slab = slab.at[off_b2, output_size].set(b2c[0])

    # baked masks: additive softmax mask (0 on actor lanes, -1e30 elsewhere)
    # and multiplicative critic-lane mask (1 at col == output_size).
    col = jnp.arange(lane_width)
    slab = slab.at[off_amask, :].set(jnp.where(col < output_size, 0.0, -1e30))
    slab = slab.at[off_cmask, :].set((col == output_size).astype(jnp.float32))

    return PackedParams(slab, input_size, hidden_size, output_size,
                        lane_width, off_b1, off_w2, off_b2,
                        off_amask, off_cmask, total_rows)


def _actor_critic_kernel(x_ref, p_ref, out_ref, *,
                         input_size, lane_width, off_b1, off_w2, off_b2,
                         off_amask, off_cmask):
    x = x_ref[...]                                           # (TB, I)

    w1 = p_ref[0:input_size, :]                              # (I,  LW)
    b1 = p_ref[off_b1:off_b1 + 1, :]                         # (1,  LW)
    w2 = p_ref[off_w2:off_w2 + lane_width, :]                # (LW, LW)
    b2 = p_ref[off_b2:off_b2 + 1, :]                         # (1,  LW)
    amask = p_ref[off_amask:off_amask + 1, :]                # 0 on actor lanes, -1e30 else
    cmask = p_ref[off_cmask:off_cmask + 1, :]                # 1 on critic lane only

    # Fused hidden layer for both heads (padded lanes stay exactly 0).
    h = jnp.maximum(jnp.dot(x, w1, preferred_element_type=jnp.float32) + b1, 0.0)
    # Fused output layer: cols [0, O) = actor logits, col O = critic value.
    z = jnp.dot(h, w2, preferred_element_type=jnp.float32) + b2     # (TB, LW)

    # Row-wise softmax over the actor lanes (baked additive mask, exact divide).
    logits = z + amask
    m = jnp.max(logits, axis=-1, keepdims=True)
    e = jnp.exp(logits - m)                                  # exactly 0 off the actor lanes
    denom = jnp.sum(e, axis=-1, keepdims=True)
    probs = e / denom                                        # exact: rows sum to 1

    # probs is already 0 on non-actor lanes -> just add the critic lane back.
    out_ref[...] = probs + z * cmask


def _choose_tile_b(batch, tile_b):
    """Pick a batch tile: big (<=512) for fewer grid-step overheads, but keep
    >= 2 grid steps when possible so v7x can shard across its 2 TensorCores."""
    if tile_b is None:
        tile_b = min(512, _round_up(pl.cdiv(batch, 2), 8))
    if tile_b >= batch:
        return batch                                         # single full-extent block
    tile_b = max(8, _round_up(tile_b, 8))                    # (8,·) sublane alignment
    if tile_b >= batch:
        return batch
    return tile_b


def actor_critic_forward_batched(states, packed: PackedParams, *, tile_b=None):
    """states: (B, input_size) -> (actor probs (B, O), critic (B, 1))."""
    batch, input_size = states.shape
    assert input_size == packed.input_size
    out_size = packed.output_size
    lw = packed.lane_width

    tile_b = _choose_tile_b(batch, tile_b)
    grid_b = pl.cdiv(batch, tile_b)                          # ragged edge block is masked

    x = states.astype(jnp.float32)

    kernel = functools.partial(
        _actor_critic_kernel,
        input_size=input_size, lane_width=lw,
        off_b1=packed.off_b1, off_w2=packed.off_w2, off_b2=packed.off_b2,
        off_amask=packed.off_amask, off_cmask=packed.off_cmask)

    out = pl.pallas_call(
        kernel,
        out_shape=jax.ShapeDtypeStruct((batch, lw), jnp.float32),
        grid=(grid_b,),
        in_specs=[
            pl.BlockSpec((tile_b, input_size), lambda b: (b, 0)),
            # Weight slab: same block every grid step -> stays VMEM-resident.
            pl.BlockSpec((packed.total_rows, lw), lambda b: (0, 0)),
        ],
        out_specs=pl.BlockSpec((tile_b, lw), lambda b: (b, 0)),
        compiler_params=pltpu.CompilerParams(
            dimension_semantics=("parallel",)),
    )(x, packed.slab)

    # Under jit these slices fuse with the consumer; no extra HBM pass when
    # this function is used inside a larger jitted computation.
    actor = out[:, :out_size]
    critic = out[:, out_size:out_size + 1]
    return actor, critic


def actor_critic_forward(state, packed: PackedParams):
    """Single 1-D state, matching the PyTorch module's forward() exactly."""
    actor, critic = actor_critic_forward_batched(state[None, :], packed)
    return actor[0], critic[0]


def reference_forward(state, params):
    """Pure-JAX reference reproducing the PyTorch forward for one 1-D state."""
    w1a, b1a, w2a, b2a, w1c, b1c, w2c, b2c = params
    dot = functools.partial(jnp.dot, precision=jax.lax.Precision.HIGHEST)
    h_a = jnp.maximum(dot(state, w1a.T) + b1a, 0.0)
    logits = dot(h_a, w2a.T) + b2a
    actor = jax.nn.softmax(logits, axis=0)                   # softmax(dim=0) on 1-D output
    h_c = jnp.maximum(dot(state, w1c.T) + b1c, 0.0)
    critic = dot(h_c, w2c.T) + b2c
    return actor, critic


if __name__ == "__main__":
    input_size, hidden_size, output_size = 16, 32, 8
    batch = 64

    key = jax.random.PRNGKey(0)
    k_states, k_params = jax.random.split(key)
    states = jax.random.normal(k_states, (batch, input_size), jnp.float32)
    raw_params = init_params(k_params, input_size, hidden_size, output_size)

    # One-time packing of weights/masks (hoisted out of the per-call hot path).
    packed = pack_params(raw_params, input_size, hidden_size, output_size)

    # Batched kernel call (grid keeps >= 2 steps; no input pad, ragged edge masked).
    actor_b, critic_b = jax.block_until_ready(
        actor_critic_forward_batched(states, packed))
    assert actor_b.shape == (batch, output_size)
    assert critic_b.shape == (batch, 1)

    # Pure-JAX per-state reference, vmapped over the batch.
    actor_ref, critic_ref = jax.vmap(
        lambda s: reference_forward(s, raw_params))(states)

    assert jnp.allclose(actor_b, actor_ref, atol=1e-4, rtol=1e-4)
    assert jnp.allclose(critic_b, critic_ref, atol=1e-4, rtol=1e-4)
    # Exact-divide softmax: rows sum to 1 to f32 precision.
    assert jnp.allclose(jnp.sum(actor_b, axis=-1), 1.0, atol=1e-5)

    # Odd batch exercises the un-padded ragged-edge path (masked edge block).
    odd = 13
    actor_o, critic_o = jax.block_until_ready(
        actor_critic_forward_batched(states[:odd], packed))
    assert jnp.allclose(actor_o, actor_ref[:odd], atol=1e-4, rtol=1e-4)
    assert jnp.allclose(critic_o, critic_ref[:odd], atol=1e-4, rtol=1e-4)

    # Single-state API (exact PyTorch semantics: 1-D state, softmax(dim=0)).
    actor1, critic1 = jax.block_until_ready(
        actor_critic_forward(states[0], packed))
    a1_ref, c1_ref = reference_forward(states[0], raw_params)
    assert actor1.shape == (output_size,) and critic1.shape == (1,)
    assert jnp.allclose(actor1, a1_ref, atol=1e-4, rtol=1e-4)
    assert jnp.allclose(critic1, c1_ref, atol=1e-4, rtol=1e-4)

    print("KERNEL_OK")
</pallas_src>

<mosaic_0001>
module attributes {stable_mosaic.version = 11 : i64} {
  func.func @_actor_critic_kernel(%arg0: i32, %arg1: memref<32x16xf32, #tpu.memory_space<vmem>>, %arg2: memref<176x128xf32, #tpu.memory_space<vmem>>, %arg3: memref<32x128xf32, #tpu.memory_space<vmem>>) attributes {dimension_semantics = [#tpu.dimension_semantics<parallel>], iteration_bounds = array<i64: 2>, scalar_prefetch = 0 : i64, scratch_operands = 0 : i64, tpu.core_type = #tpu.core_type<tc>, window_params = [{transform_indices = @transform_0, window_bounds = array<i64: 32, 16>}, {pipeline_mode = #tpu.pipeline_mode<synchronous>, transform_indices = @transform_1, window_bounds = array<i64: 176, 128>}, {transform_indices = @transform_2, window_bounds = array<i64: 32, 128>}]} {
    %c0 = arith.constant 0 : index
    %c0_0 = arith.constant 0 : index
    %0 = vector.load %arg1[%c0, %c0_0] : memref<32x16xf32, #tpu.memory_space<vmem>>, vector<32x16xf32>
    %c0_1 = arith.constant 0 : index
    %c0_2 = arith.constant 0 : index
    %1 = vector.load %arg2[%c0_1, %c0_2] : memref<176x128xf32, #tpu.memory_space<vmem>>, vector<16x128xf32>
    %c16 = arith.constant 16 : index
    %c0_3 = arith.constant 0 : index
    %2 = vector.load %arg2[%c16, %c0_3] : memref<176x128xf32, #tpu.memory_space<vmem>>, vector<1x128xf32>
    %c24 = arith.constant 24 : index
    %c0_4 = arith.constant 0 : index
    %3 = vector.load %arg2[%c24, %c0_4] : memref<176x128xf32, #tpu.memory_space<vmem>>, vector<128x128xf32>
    %c152 = arith.constant 152 : index
    %c0_5 = arith.constant 0 : index
    %4 = vector.load %arg2[%c152, %c0_5] : memref<176x128xf32, #tpu.memory_space<vmem>>, vector<1x128xf32>
    %c160 = arith.constant 160 : index
    %c0_6 = arith.constant 0 : index
    %5 = vector.load %arg2[%c160, %c0_6] : memref<176x128xf32, #tpu.memory_space<vmem>>, vector<1x128xf32>
    %c168 = arith.constant 168 : index
    %c0_7 = arith.constant 0 : index
    %6 = vector.load %arg2[%c168, %c0_7] : memref<176x128xf32, #tpu.memory_space<vmem>>, vector<1x128xf32>
    %cst = arith.constant dense<0.000000e+00> : vector<32x128xf32>
    %7 = tpu.matmul %0, %1, %cst {dimension_numbers = #tpu.dot_dimension_numbers<[1], [0], [0], [1], [0, 0, 1, 1], [], []>} : vector<32x16xf32>, vector<16x128xf32>, vector<32x128xf32> -> vector<32x128xf32>
    %8 = vector.broadcast %2 : vector<1x128xf32> to vector<32x128xf32>
    %9 = arith.addf %7, %8 : vector<32x128xf32>
    %cst_8 = arith.constant 0.000000e+00 : f32
    %10 = vector.broadcast %cst_8 : f32 to vector<32x128xf32>
    %11 = arith.maximumf %9, %10 : vector<32x128xf32>
    %cst_9 = arith.constant dense<0.000000e+00> : vector<32x128xf32>
    %12 = tpu.matmul %11, %3, %cst_9 {dimension_numbers = #tpu.dot_dimension_numbers<[1], [0], [0], [1], [0, 0, 1, 1], [], []>} : vector<32x128xf32>, vector<128x128xf32>, vector<32x128xf32> -> vector<32x128xf32>
    %13 = vector.broadcast %4 : vector<1x128xf32> to vector<32x128xf32>
    %14 = arith.addf %12, %13 : vector<32x128xf32>
    %15 = vector.broadcast %5 : vector<1x128xf32> to vector<32x128xf32>
    %16 = arith.addf %14, %15 : vector<32x128xf32>
    %cst_10 = arith.constant dense<0xFF800000> : vector<32xf32>
    %17 = vector.multi_reduction <maximumf>, %16, %cst_10 [1] : vector<32x128xf32> to vector<32xf32>
    %18 = vector.shape_cast %17 : vector<32xf32> to vector<32x1xf32>
    %19 = vector.broadcast %18 : vector<32x1xf32> to vector<32x128xf32>
    %20 = arith.subf %16, %19 : vector<32x128xf32>
    %21 = math.exp %20 : vector<32x128xf32>
    %cst_11 = arith.constant dense<0.000000e+00> : vector<32xf32>
    %22 = vector.multi_reduction <add>, %21, %cst_11 [1] : vector<32x128xf32> to vector<32xf32>
    %23 = vector.shape_cast %22 : vector<32xf32> to vector<32x1xf32>
    %24 = vector.broadcast %23 : vector<32x1xf32> to vector<32x128xf32>
    %25 = arith.divf %21, %24 : vector<32x128xf32>
    %26 = vector.broadcast %6 : vector<1x128xf32> to vector<32x128xf32>
    %27 = arith.mulf %14, %26 : vector<32x128xf32>
    %28 = arith.addf %25, %27 : vector<32x128xf32>
    %c0_12 = arith.constant 0 : index
    %c0_13 = arith.constant 0 : index
    %29 = vector.load %arg3[%c0_12, %c0_13] : memref<32x128xf32, #tpu.memory_space<vmem>>, vector<32x128xf32>
    tpu.vector_store %arg3[%c0_12, %c0_13], %28 {strides = array<i32>} : memref<32x128xf32, #tpu.memory_space<vmem>>, vector<32x128xf32>,
    return
  }
  func.func @transform_0(%arg0: i32) -> (i32, i32) {
    %c0_i32 = arith.constant 0 : i32
    %c0_i32_0 = arith.constant 0 : i32
    return %arg0, %c0_i32 : i32, i32
  }
  func.func @transform_1(%arg0: i32) -> (i32, i32) {
    %c0_i32 = arith.constant 0 : i32
    %c0_i32_0 = arith.constant 0 : i32
    %c0_i32_1 = arith.constant 0 : i32
    return %c0_i32, %c0_i32_0 : i32, i32
  }
  func.func @transform_2(%arg0: i32) -> (i32, i32) {
    %c0_i32 = arith.constant 0 : i32
    %c0_i32_0 = arith.constant 0 : i32
    return %arg0, %c0_i32 : i32, i32
  }
}

</mosaic_0001>

<llo_original>
// kernel: tpu_custom_call.1
$region0: #{tpu_custom_call.1}
  #allocation0 [shape = 'u32[]', space=smem, size = 0x4, offset = 0x4, fixed_abs, tag = 'smem constant byte address 0x4 - core index']
  #allocation1 [shape = 'u32[144,128]{1,0:T(1,128)}', space=vmem, size = 0x12000, scoped, tag = 'internal scratch']
  %s0 = inlined_call_operand.vmem [shape: f32[64,16], index: 0, kind: input, shape index: {}]
  %s1 = inlined_call_operand.hbm [shape: f32[176,128], index: 1, kind: input, shape index: {}]
  %s2 = inlined_call_operand.hbm [shape: f32[64,128], index: 2, kind: output, shape index: {}]
  %s3 = sld [smem:[#allocation0]]
  $region45: #{tpu_custom_call.1} parent=0
    _
  %s5 = ssub.s32 1, %s3
  %s6 = scalar_select 0, %s5, %s3
  $region1: #{tpu_custom_call.1} parent=0
    #allocation2 [shape = 'u8[90112]{0}', space=vmem, size = 0x16000, scoped, tag = 'input window, operand 1, single buffered']
    #allocation3 [shape = 's32[2]{0}', space=sflag, size = 0x8, scoped, tag = 'scoped memory for tpu_custom_call.1']
    #allocation4 [shape = 's32[2]{0}', space=sflag, size = 0x8, scoped, tag = 'scoped memory for tpu_custom_call.1']
    #allocation5 [shape = 'u8[32768]{0}', space=vmem, size = 0x8000, scoped, tag = 'output window, operand 0']
    %7 = vsyncpa [#allocation3], 0
    %8 = vsyncpa [#allocation4], 0
    %s9 = scalar_lea.sflag [#allocation4], 1
    %10 = vsyncpa %s9, 0
    loop: start=0, step=1, limit=4
    $region2: #{tpu_custom_call.1} parent=1 // loop_pre_header
      _
    $region3: #{tpu_custom_call.1} parent=1 // loop_header
      %s12 = sphi 0, %s16
      %p13 = scmp.ge.s32.totalorder %s12, 4
      %s22 = sphi 0, %s24
      %s25 = sphi 0, %s22
      %s26 = sphi 0, %s25
      %s42 = sphi 0, %s26
      %s46 = sphi 0, %s46
      %s48 = sphi 0, %s46
      %s49 = sphi 0, %s48
      %s63 = sphi 0, %s49
      %s69 = sphi 0, %s71
      %s72 = sphi 0, %s69
      %s73 = sphi 0, %s72
      %s89 = sphi 0, %s73
    $region4: #{tpu_custom_call.1} parent=1 // loop_header_branch
      %15 = sbr.rel (%p13) target = $region8
    $region5: #{tpu_custom_call.1} parent=1 // loop_body
      %s17 = ssub.s32 %s12, 1
      %s18 = ssub.s32 %s12, 2
      %s19 = sadd.s32 %s12, 1
      %s20 = ssub.s32 %s12, %s19
      %p21 = scmp.eq.s32.totalorder %s20, 0
      %s23 = sadd.s32 %s22, 1
      %s24 = scalar_select %p21, %s22, %s23
      %p27 = pneg %p21
      %p28 = scmp.eq.s32.totalorder %s12, 1
      %p29 = por %p27, %p28
      %p30 = scmp.ne.s32.totalorder %s22, %s25
      %p31 = scmp.eq.s32.totalorder %s12, 0
      %p32 = por %p30, %p31
      %p33 = scmp.ne.s32.totalorder %s22, %s25
      %p34 = scmp.eq.s32.totalorder %s17, 1
      %p35 = por %p33, %p34
      %p36 = scmp.ne.s32.totalorder %s25, %s26
      %p37 = scmp.eq.s32.totalorder %s17, 0
      %p38 = por %p36, %p37
      %p39 = scmp.ne.s32.totalorder %s25, %s26
      %p40 = scmp.eq.s32.totalorder %s18, 1
      %p41 = por %p39, %p40
      %p43 = scmp.ne.s32.totalorder %s26, %s42
      %p44 = scmp.eq.s32.totalorder %s18, 0
      %p45 = por %p43, %p44
      %s47 = sadd.s32 %s46, 1
      %p50 = scmp.eq.s32.totalorder %s12, 1
      %p51 = scmp.ne.s32.totalorder %s46, %s48
      %p52 = scmp.eq.s32.totalorder %s12, 0
      %p53 = por %p51, %p52
      %p54 = scmp.ne.s32.totalorder %s46, %s48
      %p55 = scmp.eq.s32.totalorder %s17, 1
      %p56 = por %p54, %p55
      %p57 = scmp.ne.s32.totalorder %s48, %s49
      %p58 = scmp.eq.s32.totalorder %s17, 0
      %p59 = por %p57, %p58
      %p60 = scmp.ne.s32.totalorder %s48, %s49
      %p61 = scmp.eq.s32.totalorder %s18, 1
      %p62 = por %p60, %p61
      %p64 = scmp.ne.s32.totalorder %s49, %s63
      %p65 = scmp.eq.s32.totalorder %s18, 0
      %p66 = por %p64, %p65
      %s67 = ssub.s32 %s12, %s19
      %p68 = scmp.eq.s32.totalorder %s67, 0
      %s70 = sadd.s32 %s69, 1
      %s71 = scalar_select %p68, %s69, %s70
      %p74 = pneg %p68
      %p75 = scmp.eq.s32.totalorder %s12, 1
      %p76 = por %p74, %p75
      %p77 = scmp.ne.s32.totalorder %s69, %s72
      %p78 = scmp.eq.s32.totalorder %s12, 0
      %p79 = por %p77, %p78
      %p80 = scmp.ne.s32.totalorder %s69, %s72
      %p81 = scmp.eq.s32.totalorder %s17, 1
      %p82 = por %p80, %p81
      %p83 = scmp.ne.s32.totalorder %s72, %s73
      %p84 = scmp.eq.s32.totalorder %s17, 0
      %p85 = por %p83, %p84
      %p86 = scmp.ne.s32.totalorder %s72, %s73
      %p87 = scmp.eq.s32.totalorder %s18, 1
      %p88 = por %p86, %p87
      %p90 = scmp.ne.s32.totalorder %s73, %s89
      %p91 = scmp.eq.s32.totalorder %s18, 0
      %p92 = por %p90, %p91
      %p93 = scmp.le.s32.totalorder 1, %s12
      %p94 = scmp.lt.s32.totalorder %s12, 3
      %p95 = pnand %p93, %p94
      %p96 = pneg %p95
      // Predicated region
      $region9: #{tpu_custom_call.1} parent=5 // pred_check
        _
      $region10: #{tpu_custom_call.1} parent=5 // pred_check_branch
        %98 = sbr.rel (%p95) target = $region12
      $region11: #{tpu_custom_call.1} parent=5 // pred_region
        %s99 = ssub.s32 %s12, 1
        // Predicated region
        $region13: #{tpu_custom_call.1} parent=11 // pred_check
          %p100 = pneg %p59
        $region14: #{tpu_custom_call.1} parent=11 // pred_check_branch
          %102 = sbr.rel (%p100) target = $region16
        $region15: #{tpu_custom_call.1} parent=11 // pred_region
          %s104 = ssub.s32 2816, 2816
          %105 = vsyncadd [#allocation3], %s104
          %s106 = sshll.u32 [#allocation2], 4
          %s107 = int_to_ptr.vmem [resolvable:$true] %s106
          %112 = dma.hbm_to_vmem [thread:$0]  %s1, 2816, %s107, [#allocation3], 128, 128, 8
        $region16: #{tpu_custom_call.1} parent=11 // pred_fallthru
          _
      $region12: #{tpu_custom_call.1} parent=5 // pred_fallthru
        _
      %p113 = scmp.lt.s32.totalorder %s12, 2
      // Predicated region
      $region17: #{tpu_custom_call.1} parent=5 // pred_check
        %p114 = pneg %p113
      $region18: #{tpu_custom_call.1} parent=5 // pred_check_branch
        %116 = sbr.rel (%p114) target = $region20
      $region19: #{tpu_custom_call.1} parent=5 // pred_region
        // Predicated region
        $region21: #{tpu_custom_call.1} parent=19 // pred_check
          %p117 = pneg %p32
        $region22: #{tpu_custom_call.1} parent=19 // pred_check_branch
          %119 = sbr.rel (%p117) target = $region24
        $region23: #{tpu_custom_call.1} parent=19 // pred_region
          %s120 = smul.u32 4, %s12
          %p121 = scmp.lt.s32.totalorder %s120, 7
          %s122 = scalar_select %p121, %s120, 7
          %s123 = smul.addr %s122, 8
          %s124 = scalar_lea.vmem %s0, %s123
          %s125 = smul.u32 4, %s12
        $region24: #{tpu_custom_call.1} parent=19 // pred_fallthru
          _
      $region20: #{tpu_custom_call.1} parent=5 // pred_fallthru
        _
      %p126 = scmp.le.s32.totalorder 1, %s12
      %p127 = scmp.lt.s32.totalorder %s12, 3
      %p128 = pnand %p126, %p127
      %p129 = pneg %p128
      // Predicated region
      $region25: #{tpu_custom_call.1} parent=5 // pred_check
        _
      $region26: #{tpu_custom_call.1} parent=5 // pred_check_branch
        %131 = sbr.rel (%p128) target = $region28
      $region27: #{tpu_custom_call.1} parent=5 // pred_region
        %s132 = ssub.s32 %s12, 1
        // Predicated region
        $region29: #{tpu_custom_call.1} parent=27 // pred_check
          %p133 = pneg %p59
        $region30: #{tpu_custom_call.1} parent=27 // pred_check_branch
          %135 = sbr.rel (%p133) target = $region32
        $region31: #{tpu_custom_call.1} parent=27 // pred_region
          %136 = dma.done [#allocation3], 2816
        $region32: #{tpu_custom_call.1} parent=27 // pred_fallthru
          _
        %s137 = smul.u32 4, %s17
        %p138 = scmp.lt.s32.totalorder %s137, 7
        %s139 = scalar_select %p138, %s137, 7
        %s140 = smul.addr %s139, 8
        %s141 = scalar_lea.vmem %s0, %s140
        %p142 = pneg %p38
        %p143 = pneg %p35
        %p144 = pneg %p59
        %p145 = pneg %p56
        %p146 = pneg %p85
        %p147 = pneg %p82
        %s148 = sand.u32 %s72, 1
        %s149 = scalar_lea.sflag [#allocation4], %s148
        %s150 = sand.u32 %s72, 1
        %s151 = smul.addr %s150, 32
        %s152 = scalar_lea.vmem [#allocation5], %s151
        %s153 = smul.u32 4, %s17
        %p154 = scmp.lt.s32.totalorder %s153, 7
        %s155 = scalar_select %p154, %s153, 7
        %s156 = smul.addr %s155, 8
        %s157 = scalar_lea.vmem %s0, %s156
        %s158 = smul.u32 4, %s17
        %s159 = smul.u32 4, %s17
        %v160 = vld [vmem:[%s157] sm:$0xff]
        %v161 = vld [vmem:[%s157 + $0x8] sm:$0xff]
        %v162 = vld [vmem:[%s157 + $0x10] sm:$0xff]
        %v163 = vld [vmem:[%s157 + $0x18] sm:$0xff]
        %v164 = vld [vmem:[#allocation2] sm:$0xff]
        %v165 = vld [vmem:[#allocation2 + $0x8] sm:$0xff]
        %v166 = vld [vmem:[#allocation2 + $0x10] sm:$0x1]
        %v167 = vld [vmem:[#allocation2 + $0x18] sm:$0xff]
        %v168 = vld [vmem:[#allocation2 + $0x20] sm:$0xff]
        %v169 = vld [vmem:[#allocation2 + $0x28] sm:$0xff]
        %v170 = vld [vmem:[#allocation2 + $0x30] sm:$0xff]
        %v171 = vld [vmem:[#allocation2 + $0x38] sm:$0xff]
        %v172 = vld [vmem:[#allocation2 + $0x40] sm:$0xff]
        %v173 = vld [vmem:[#allocation2 + $0x48] sm:$0xff]
        %v174 = vld [vmem:[#allocation2 + $0x50] sm:$0xff]
        %v175 = vld [vmem:[#allocation2 + $0x58] sm:$0xff]
        %v176 = vld [vmem:[#allocation2 + $0x60] sm:$0xff]
        %v177 = vld [vmem:[#allocation2 + $0x68] sm:$0xff]
        %v178 = vld [vmem:[#allocation2 + $0x70] sm:$0xff]
        %v179 = vld [vmem:[#allocation2 + $0x78] sm:$0xff]
        %v180 = vld [vmem:[#allocation2 + $0x80] sm:$0xff]
        %v181 = vld [vmem:[#allocation2 + $0x88] sm:$0xff]
        %v182 = vld [vmem:[#allocation2 + $0x90] sm:$0xff]
        %v183 = vld [vmem:[#allocation2 + $0x98] sm:$0x1]
        %v184 = vld [vmem:[#allocation2 + $0xa0] sm:$0x1]
        %v185 = vld [vmem:[#allocation2 + $0xa8] sm:$0x1]
        %v186 = vlaneseq
        %v187 = vshrl.u32 %v186, 7
        %v188 = vsub.s32 0, %v187
        %v189 = vrot.slane %v166, %v188
        %vm190 = vcmask 130048
        %v192 = vsel %vm190, %v160, 0
        %v195 = vsel %vm190, %v161, 0
        %v198 = vsel %vm190, %v162, 0
        %v201 = vsel %vm190, %v163, 0
        %203 = vmatprep.subr.mxu0 0.0
        %204 = vmatpush1.msra.mxu0 %v164
        %205 = vmatprep.subr.mxu0 0.0
        %206 = vmatpush1.msra.mxu0 %v165
        %207 = vmatprep.subr.mxu0 0.0
        %208 = vmatpush1.msra.mxu0 0.0
        %209 = vmatprep.subr.mxu0 0.0
        %210 = vmatpush1.msra.mxu0 0.0
        %211 = vmatprep.subr.mxu0 0.0
        %212 = vmatpush1.msra.mxu0 0.0
        %213 = vmatprep.subr.mxu0 0.0
        %214 = vmatpush1.msra.mxu0 0.0
        %215 = vmatprep.subr.mxu0 0.0
        %216 = vmatpush1.msra.mxu0 0.0
        %217 = vmatprep.subr.mxu0 0.0
        %218 = vmatpush1.msra.mxu0 0.0
        %219 = vmatprep.subr.mxu0 0.0
        %220 = vmatpush1.msra.mxu0 0.0
        %221 = vmatprep.subr.mxu0 0.0
        %222 = vmatpush1.msra.mxu0 0.0
        %223 = vmatprep.subr.mxu0 0.0
        %224 = vmatpush1.msra.mxu0 0.0
        %225 = vmatprep.subr.mxu0 0.0
        %226 = vmatpush1.msra.mxu0 0.0
        %227 = vmatprep.subr.mxu0 0.0
        %228 = vmatpush1.msra.mxu0 0.0
        %229 = vmatprep.subr.mxu0 0.0
        %230 = vmatpush1.msra.mxu0 0.0
        %231 = vmatprep.subr.mxu0 0.0
        %232 = vmatpush1.msra.mxu0 0.0
        %233 = vmatprep.subr.mxu0 0.0
        %234 = vmatpush1.msra.mxu0 0.0
        %235 = vmatprep.subr.mxu0 0.0
        %236 = vmatpush1.msra.mxu0 0.0
        %237 = vmatprep.subr.mxu0 0.0
        %238 = vmatpush1.msra.mxu0 0.0
        %239 = vmatprep.subr.mxu0 0.0
        %240 = vmatpush1.msra.mxu0 0.0
        %241 = vmatprep.subr.mxu0 0.0
        %242 = vmatpush1.msra.mxu0 0.0
        %243 = vmatprep.subr.mxu0 0.0
        %244 = vmatpush1.msra.mxu0 0.0
        %245 = vmatprep.subr.mxu0 0.0
        %246 = vmatpush1.msra.mxu0 0.0
        %247 = vmatprep.subr.mxu0 0.0
        %248 = vmatpush1.msra.mxu0 0.0
        %249 = vmatprep.subr.mxu0 0.0
        %250 = vmatpush1.msra.mxu0 0.0
        %251 = vmatprep.subr.mxu0 0.0
        %252 = vmatpush1.msra.mxu0 0.0
        %253 = vmatprep.subr.mxu0 0.0
        %254 = vmatpush1.msra.mxu0 0.0
        %255 = vmatprep.subr.mxu0 0.0
        %256 = vmatpush1.msra.mxu0 0.0
        %257 = vmatprep.subr.mxu0 0.0
        %258 = vmatpush1.msra.mxu0 0.0
        %259 = vmatprep.subr.mxu0 0.0
        %260 = vmatpush1.msra.mxu0 0.0
        %261 = vmatprep.subr.mxu0 0.0
        %262 = vmatpush1.msra.mxu0 0.0
        %263 = vmatprep.subr.mxu0 0.0
        %264 = vmatpush1.msra.mxu0 0.0
        %265 = vmatprep.subr.mxu0 0.0
        %266 = vmatpush1.msra.mxu0 0.0
        %267 = vmatprep.mubr.f32.mxu0 0.0
        %268 = vmatmul.mubr.f32.gmra.mrb[0].mxu0 %v192
        %v269 = vpop.f32.mrb[0].mxu0
        %v270 = vadd.f32 %v189, %v269
        %v271 = vpop.f32.mrb[0].mxu0
        %272 = vmatprep.mubr.f32.mxu0 0.0
        %273 = vmatmul.mubr.f32.gmra.mrb[0].mxu0 %v195
        %v274 = vpop.f32.mrb[0].mxu0
        %v275 = vadd.f32 %v189, %v274
        %v276 = vpop.f32.mrb[0].mxu0
        %277 = vmatprep.mubr.f32.mxu0 0.0
        %278 = vmatmul.mubr.f32.gmra.mrb[0].mxu0 %v198
        %v279 = vpop.f32.mrb[0].mxu0
        %v280 = vadd.f32 %v189, %v279
        %v281 = vpop.f32.mrb[0].mxu0
        %282 = vmatprep.mubr.f32.mxu0 0.0
        %283 = vmatmul.mubr.f32.gmra.mrb[0].mxu0 %v201
        %v284 = vpop.f32.mrb[0].mxu0
        %v285 = vadd.f32 %v189, %v284
        %v286 = vpop.f32.mrb[0].mxu0
        %287 = vdwg.mxu0
        %v288 = vmax.f32 %v270, 0.0
        %v289 = vmax.f32 %v275, 0.0
        %v290 = vmax.f32 %v280, 0.0
        %v291 = vmax.f32 %v285, 0.0
        %v292 = vlaneseq
        %v293 = vshrl.u32 %v292, 7
        %v294 = vsub.s32 0, %v293
        %v295 = vrot.slane %v183, %v294
        %296 = vmatprep.subr.mxu0 0.0
        %297 = vmatpush1.msra.mxu0 %v167
        %298 = vmatprep.subr.mxu0 0.0
        %299 = vmatpush1.msra.mxu0 %v168
        %300 = vmatprep.subr.mxu0 0.0
        %301 = vmatpush1.msra.mxu0 %v169
        %302 = vmatprep.subr.mxu0 0.0
        %303 = vmatpush1.msra.mxu0 %v170
        %304 = vmatprep.subr.mxu0 0.0
        %305 = vmatpush1.msra.mxu0 %v171
        %306 = vmatprep.subr.mxu0 0.0
        %307 = vmatpush1.msra.mxu0 %v172
        %308 = vmatprep.subr.mxu0 0.0
        %309 = vmatpush1.msra.mxu0 %v173
        %310 = vmatprep.subr.mxu0 0.0
        %311 = vmatpush1.msra.mxu0 %v174
        %312 = vmatprep.subr.mxu0 0.0
        %313 = vmatpush1.msra.mxu0 %v175
        %314 = vmatprep.subr.mxu0 0.0
        %315 = vmatpush1.msra.mxu0 %v176
        %316 = vmatprep.subr.mxu0 0.0
        %317 = vmatpush1.msra.mxu0 %v177
        %318 = vmatprep.subr.mxu0 0.0
        %319 = vmatpush1.msra.mxu0 %v178
        %320 = vmatprep.subr.mxu0 0.0
        %321 = vmatpush1.msra.mxu0 %v179
        %322 = vmatprep.subr.mxu0 0.0
        %323 = vmatpush1.msra.mxu0 %v180
        %324 = vmatprep.subr.mxu0 0.0
        %325 = vmatpush1.msra.mxu0 %v181
        %326 = vmatprep.subr.mxu0 0.0
        %327 = vmatpush1.msra.mxu0 %v182
        %328 = vmatprep.subr.mxu0 0.0
        %329 = vmatpush1.msra.mxu0 0.0
        %330 = vmatprep.subr.mxu0 0.0
        %331 = vmatpush1.msra.mxu0 0.0
        %332 = vmatprep.subr.mxu0 0.0
        %333 = vmatpush1.msra.mxu0 0.0
        %334 = vmatprep.subr.mxu0 0.0
        %335 = vmatpush1.msra.mxu0 0.0
        %336 = vmatprep.subr.mxu0 0.0
        %337 = vmatpush1.msra.mxu0 0.0
        %338 = vmatprep.subr.mxu0 0.0
        %339 = vmatpush1.msra.mxu0 0.0
        %340 = vmatprep.subr.mxu0 0.0
        %341 = vmatpush1.msra.mxu0 0.0
        %342 = vmatprep.subr.mxu0 0.0
        %343 = vmatpush1.msra.mxu0 0.0
        %344 = vmatprep.subr.mxu0 0.0
        %345 = vmatpush1.msra.mxu0 0.0
        %346 = vmatprep.subr.mxu0 0.0
        %347 = vmatpush1.msra.mxu0 0.0
        %348 = vmatprep.subr.mxu0 0.0
        %349 = vmatpush1.msra.mxu0 0.0
        %350 = vmatprep.subr.mxu0 0.0
        %351 = vmatpush1.msra.mxu0 0.0
        %352 = vmatprep.subr.mxu0 0.0
        %353 = vmatpush1.msra.mxu0 0.0
        %354 = vmatprep.subr.mxu0 0.0
        %355 = vmatpush1.msra.mxu0 0.0
        %356 = vmatprep.subr.mxu0 0.0
        %357 = vmatpush1.msra.mxu0 0.0
        %358 = vmatprep.subr.mxu0 0.0
        %359 = vmatpush1.msra.mxu0 0.0
        %360 = vmatprep.mubr.f32.mxu0 0.0
        %361 = vmatmul.mubr.f32.gmra.mrb[0].mxu0 %v288
        %v362 = vpop.f32.mrb[0].mxu0
        %v363 = vadd.f32 %v295, %v362
        %v364 = vpop.f32.mrb[0].mxu0
        %365 = vmatprep.mubr.f32.mxu0 0.0
        %366 = vmatmul.mubr.f32.gmra.mrb[0].mxu0 %v289
        %v367 = vpop.f32.mrb[0].mxu0
        %v368 = vadd.f32 %v295, %v367
        %v369 = vpop.f32.mrb[0].mxu0
        %370 = vmatprep.mubr.f32.mxu0 0.0
        %371 = vmatmul.mubr.f32.gmra.mrb[0].mxu0 %v290
        %v372 = vpop.f32.mrb[0].mxu0
        %v373 = vadd.f32 %v295, %v372
        %v374 = vpop.f32.mrb[0].mxu0
        %375 = vmatprep.mubr.f32.mxu0 0.0
        %376 = vmatmul.mubr.f32.gmra.mrb[0].mxu0 %v291
        %v377 = vpop.f32.mrb[0].mxu0
        %v378 = vadd.f32 %v295, %v377
        %v379 = vpop.f32.mrb[0].mxu0
        %380 = vdwg.mxu0
        %v381 = vlaneseq
        %v382 = vshrl.u32 %v381, 7
        %v383 = vsub.s32 0, %v382
        %v384 = vrot.slane %v184, %v383
        %v385 = vadd.f32 %v363, %v384
        %v386 = vadd.f32 %v368, %v384
        %v387 = vadd.f32 %v373, %v384
        %v388 = vadd.f32 %v378, %v384
        %389 = vmax.xlane.f32.xlu0 %v385
        %v390 = vpop.xlane.xlu0 %389
        %391 = vmax.xlane.f32.xlu0 %v386
        %v392 = vpop.xlane.xlu0 %391
        %393 = vmax.xlane.f32.xlu0 %v387
        %v394 = vpop.xlane.xlu0 %393
        %395 = vmax.xlane.f32.xlu0 %v388
        %v396 = vpop.xlane.xlu0 %395
        %v397 = vsub.f32 %v385, %v390
        %v398 = vsub.f32 %v386, %v392
        %v399 = vsub.f32 %v387, %v394
        %v400 = vsub.f32 %v388, %v396
        %v401 = vmul.f32 %v397, 1.442695
        %v402 = vpow.pop %v401
        %v403 = vmul.f32 %v398, 1.442695
        %v404 = vpow.pop %v403
        %v405 = vmul.f32 %v399, 1.442695
        %v406 = vpow.pop %v405
        %v407 = vmul.f32 %v400, 1.442695
        %v408 = vpow.pop %v407
        %409 = vadd.xlane.f32.xlu0 %v402
        %v410 = vpop.xlane.xlu0 %409
        %411 = vadd.xlane.f32.xlu0 %v404
        %v412 = vpop.xlane.xlu0 %411
        %413 = vadd.xlane.f32.xlu0 %v406
        %v414 = vpop.xlane.xlu0 %413
        %415 = vadd.xlane.f32.xlu0 %v408
        %v416 = vpop.xlane.xlu0 %415
        %v417 = vrcp.pop %v410
        %v418 = vmul.f32 %v402, %v417
        %v419 = vrcp.pop %v412
        %v420 = vmul.f32 %v404, %v419
        %v421 = vrcp.pop %v414
        %v422 = vmul.f32 %v406, %v421
        %v423 = vrcp.pop %v416
        %v424 = vmul.f32 %v408, %v423
        %v425 = vlaneseq
        %v426 = vshrl.u32 %v425, 7
        %v427 = vsub.s32 0, %v426
        %v428 = vrot.slane %v185, %v427
        %v429 = vmul.f32 %v363, %v428
        %v430 = vmul.f32 %v368, %v428
        %v431 = vmul.f32 %v373, %v428
        %v432 = vmul.f32 %v378, %v428
        %v433 = vadd.f32 %v418, %v429
        %v434 = vadd.f32 %v420, %v430
        %v435 = vadd.f32 %v422, %v431
        %v436 = vadd.f32 %v424, %v432
        %437 = vst [vmem:[%s152] sm:$0xff] %v433
        %438 = vst [vmem:[%s152 + $0x8] sm:$0xff] %v434
        %439 = vst [vmem:[%s152 + $0x10] sm:$0xff] %v435
        %440 = vst [vmem:[%s152 + $0x18] sm:$0xff] %v436
        %s441 = sand.u32 %s72, 1
        %s442 = scalar_lea.sflag [#allocation4], %s441
        %s443 = sand.u32 %s72, 1
        %s444 = smul.addr %s443, 32
        %s445 = scalar_lea.vmem [#allocation5], %s444
        // Predicated region
        $region33: #{tpu_custom_call.1} parent=27 // pred_check
          %p446 = pneg %p82
        $region34: #{tpu_custom_call.1} parent=27 // pred_check_branch
          %448 = sbr.rel (%p446) target = $region36
        $region35: #{tpu_custom_call.1} parent=27 // pred_region
          %s449 = smul.u32 4, %s17
          %s451 = ssub.s32 512, 512
          %452 = vsyncadd %s442, %s451
          %s453 = smul.addr %s449, 128
          %s454 = scalar_lea.hbm %s2, %s453
          %s455 = sshll.u32 %s445, 4
          %s456 = int_to_ptr.vmem [resolvable:$true] %s455
          %461 = dma.vmem_to_hbm [thread:$0]  %s456, 512, %s454, %s442, 128, 128, 8
        $region36: #{tpu_custom_call.1} parent=27 // pred_fallthru
          _
      $region28: #{tpu_custom_call.1} parent=5 // pred_fallthru
        _
      %p462 = scmp.le.s32.totalorder 2, %s12
      // Predicated region
      $region37: #{tpu_custom_call.1} parent=5 // pred_check
        %p463 = pneg %p462
      $region38: #{tpu_custom_call.1} parent=5 // pred_check_branch
        %465 = sbr.rel (%p463) target = $region40
      $region39: #{tpu_custom_call.1} parent=5 // pred_region
        %s466 = ssub.s32 %s12, 2
        // Predicated region
        $region41: #{tpu_custom_call.1} parent=39 // pred_check
          %p467 = pneg %p88
        $region42: #{tpu_custom_call.1} parent=39 // pred_check_branch
          %469 = sbr.rel (%p467) target = $region44
        $region43: #{tpu_custom_call.1} parent=39 // pred_region
          %s470 = sand.u32 %s73, 1
          %s471 = scalar_lea.sflag [#allocation4], %s470
          %s472 = sand.u32 %s73, 1
          %s473 = smul.addr %s472, 32
          %s474 = scalar_lea.vmem [#allocation5], %s473
          %475 = dma.done %s471, 512
        $region44: #{tpu_custom_call.1} parent=39 // pred_fallthru
          _
      $region40: #{tpu_custom_call.1} parent=5 // pred_fallthru
        _
    $region6: #{tpu_custom_call.1} parent=1 // loop_footer
      %s16 = sadd.s32 1, %s12
    $region7: #{tpu_custom_call.1} parent=1 // loop_footer_branch
      %11 = sbr.rel target = $region3
    $region8: #{tpu_custom_call.1} parent=1 // loop_exit
      _
    %476 = vsyncpa [#allocation3], 1
    %s477 = scalar_lea.sflag [#allocation3], 1
    %478 = vsyncpa %s477, 1
    %479 = vsyncpa [#allocation4], 1
    %s480 = scalar_lea.sflag [#allocation4], 1
    %481 = vsyncpa %s480, 1

</llo_original>
